<compile_context>
chip_gen: v7x
topology: tpu7x:2x2x1
jax: 0.10.0
libtpu: 0.0.40
codegen_flags: <defaults>
</compile_context>

<pallas_src>
import functools
from types import SimpleNamespace

import numpy as np
import jax
import jax.numpy as jnp
from jax.experimental import pallas as pl
from jax.experimental.pallas import tpu as pltpu


_LANES = 128
_SUBLANES = 8


def _false_measurement_kernel(x_ref, id_ref, out_ref, sum_ref, cnt_ref, *, pos_weight):
    """One grid step: masked BCE-with-logits partial sums; finalize on last step."""
    step = pl.program_id(0)

    @pl.when(step == 0)
    def _init():
        sum_ref[...] = jnp.zeros_like(sum_ref)
        cnt_ref[...] = jnp.zeros_like(cnt_ref)

    x = x_ref[...].astype(jnp.float32)        # [TR, 128]
    ids = id_ref[...]                         # [TR, 128] int32

    valid = (ids != -2).astype(jnp.float32)   # padding / ignored entries
    y = (ids == -1).astype(jnp.float32)       # false measurements -> positive class

    # Numerically stable BCE-with-logits, PyTorch pos_weight semantics:
    #   bce = (1 - y) * x + (1 + (pw - 1) * y) * softplus(-x)
    sp = jnp.maximum(-x, 0.0) + jnp.log(1.0 + jnp.exp(-jnp.abs(x)))
    bce = (1.0 - y) * x + (1.0 + (pos_weight - 1.0) * y) * sp

    # Lane-dense partial accumulation (sublane reduce only; cheap XLU work).
    sum_ref[...] += jnp.sum(bce * valid, axis=0, keepdims=True)   # [1, 128]
    cnt_ref[...] += jnp.sum(valid, axis=0, keepdims=True)         # [1, 128]

    @pl.when(step == pl.num_programs(0) - 1)
    def _finalize():
        s = jnp.sum(sum_ref[...], axis=1, keepdims=True)          # [1, 1]
        c = jnp.sum(cnt_ref[...], axis=1, keepdims=True)          # [1, 1]
        # mean over valid elements, then the extra "/ len(tgt)" of the reference.
        out_ref[...] = s / (c * c)


@functools.partial(jax.jit, static_argnames=("pos_weight", "block_rows"))
def false_measurement_loss(log_classifications, unique_ids, *, pos_weight,
                           block_rows=512):
    x = log_classifications.reshape(-1).astype(jnp.float32)
    ids = unique_ids.reshape(-1).astype(jnp.int32)
    n = x.shape[0]

    # Pad to a lane-dense (rows, 128) slab, rows a multiple of the row-block size.
    rows = -(-n // _LANES)
    rows = -(-rows // _SUBLANES) * _SUBLANES
    tr = min(int(block_rows), rows)           # block_rows is a multiple of 8
    grid_n = -(-rows // tr)
    rows = grid_n * tr
    pad = rows * _LANES - n
    x = jnp.pad(x, (0, pad)).reshape(rows, _LANES)
    ids = jnp.pad(ids, (0, pad), constant_values=-2).reshape(rows, _LANES)

    kernel = functools.partial(_false_measurement_kernel, pos_weight=float(pos_weight))
    out = pl.pallas_call(
        kernel,
        out_shape=jax.ShapeDtypeStruct((1, 1), jnp.float32),
        grid_spec=pltpu.PrefetchScalarGridSpec(
            num_scalar_prefetch=0,
            grid=(grid_n,),
            in_specs=[pl.BlockSpec((tr, _LANES), lambda i: (i, 0)),
                      pl.BlockSpec((tr, _LANES), lambda i: (i, 0))],
            out_specs=pl.BlockSpec((1, 1), lambda i: (0, 0)),
            scratch_shapes=[pltpu.VMEM((1, _LANES), jnp.float32),
                            pltpu.VMEM((1, _LANES), jnp.float32)],
        ),
        compiler_params=pltpu.CompilerParams(dimension_semantics=("arbitrary",)),
    )(x, ids)
    return out[0, 0]


class FalseMeasurementLoss:
    """Pallas/JAX port of the PyTorch FalseMeasurementLoss module."""

    def __init__(self, params):
        self.pos_weight = (float(params.data_generation.n_avg_false_measurements)
                           / float(params.data_generation.n_avg_starting_objects))
        # TODO(synk): params.training.device is ignored; JAX uses its default TPU backend.

    def forward(self, log_classifications, unique_ids):
        return false_measurement_loss(log_classifications, unique_ids,
                                      pos_weight=self.pos_weight)

    __call__ = forward


def _reference_loss(log_classifications, unique_ids, pos_weight):
    """Pure NumPy reference (mirrors the PyTorch module) for correctness checking."""
    x = np.asarray(log_classifications, dtype=np.float64).reshape(-1)
    ids = np.asarray(unique_ids).reshape(-1)
    keep = ids != -2
    xo = x[keep]
    y = (ids[keep] == -1).astype(np.float64)
    sp = np.maximum(-xo, 0.0) + np.log1p(np.exp(-np.abs(xo)))
    bce = (1.0 - y) * xo + (1.0 + (pos_weight - 1.0) * y) * sp
    nv = xo.size
    return bce.sum() / nv / nv


if __name__ == "__main__":
    params = SimpleNamespace(
        training=SimpleNamespace(device='tpu'),
        data_generation=SimpleNamespace(n_avg_false_measurements=4.0,
                                        n_avg_starting_objects=2.0),
    )
    loss_mod = FalseMeasurementLoss(params)

    key = jax.random.PRNGKey(0)
    k1, k2, k3, k4 = jax.random.split(key, 4)

    # Small case (typical [batch, n_measurements] inputs of the module).
    B, N = 2, 16
    log_classifications = jax.random.normal(k1, (B, N), dtype=jnp.float32)
    unique_ids = jax.random.randint(k2, (B, N), -2, 4, dtype=jnp.int32)

    loss = jax.block_until_ready(loss_mod(log_classifications, unique_ids))
    ref = _reference_loss(log_classifications, unique_ids, loss_mod.pos_weight)
    assert np.isfinite(float(loss))
    assert np.allclose(float(loss), ref, rtol=1e-4, atol=0.0), (float(loss), ref)

    # Larger case: exercises the multi-step (grid > 1) accumulation path.
    B2, N2 = 32, 4096
    log2 = jax.random.normal(k3, (B2, N2), dtype=jnp.float32)
    ids2 = jax.random.randint(k4, (B2, N2), -2, 8, dtype=jnp.int32)
    loss2 = jax.block_until_ready(loss_mod(log2, ids2))
    ref2 = _reference_loss(log2, ids2, loss_mod.pos_weight)
    assert np.isfinite(float(loss2))
    assert np.allclose(float(loss2), ref2, rtol=1e-4, atol=0.0), (float(loss2), ref2)

    print("KERNEL_OK")
</pallas_src>

<mosaic_0001>
module attributes {stable_mosaic.version = 11 : i64} {
  func.func @_false_measurement_kernel(%arg0: i32, %arg1: memref<8x128xf32, #tpu.memory_space<vmem>>, %arg2: memref<8x128xi32, #tpu.memory_space<vmem>>, %arg3: memref<1x1xf32, #tpu.memory_space<vmem>>, %arg4: memref<1x128xf32, #tpu.memory_space<vmem>>, %arg5: memref<1x128xf32, #tpu.memory_space<vmem>>) attributes {dimension_semantics = [#tpu.dimension_semantics<arbitrary>], iteration_bounds = array<i64: 1>, scalar_prefetch = 0 : i64, scratch_operands = 2 : i64, tpu.core_type = #tpu.core_type<tc>, window_params = [{transform_indices = @transform_0, window_bounds = array<i64: 8, 128>}, {transform_indices = @transform_1, window_bounds = array<i64: 8, 128>}, {pipeline_mode = #tpu.pipeline_mode<synchronous>, transform_indices = @transform_2, window_bounds = array<i64: 1, 1>}]} {
    %c0_i32 = arith.constant 0 : i32
    %0 = arith.cmpi eq, %arg0, %c0_i32 : i32
    %1 = arith.extui %0 : i1 to i32
    %c0_i32_0 = arith.constant 0 : i32
    %2 = arith.cmpi ne, %1, %c0_i32_0 : i32
    scf.if %2 {
      %cst_22 = arith.constant 0.000000e+00 : f32
      %48 = vector.broadcast %cst_22 : f32 to vector<1x128xf32>
      %c0_23 = arith.constant 0 : index
      %c0_24 = arith.constant 0 : index
      %49 = vector.load %arg4[%c0_23, %c0_24] : memref<1x128xf32, #tpu.memory_space<vmem>>, vector<1x128xf32>
      tpu.vector_store %arg4[%c0_23, %c0_24], %48 {strides = array<i32>} : memref<1x128xf32, #tpu.memory_space<vmem>>, vector<1x128xf32>,
      %cst_25 = arith.constant 0.000000e+00 : f32
      %50 = vector.broadcast %cst_25 : f32 to vector<1x128xf32>
      %c0_26 = arith.constant 0 : index
      %c0_27 = arith.constant 0 : index
      %51 = vector.load %arg5[%c0_26, %c0_27] : memref<1x128xf32, #tpu.memory_space<vmem>>, vector<1x128xf32>
      tpu.vector_store %arg5[%c0_26, %c0_27], %50 {strides = array<i32>} : memref<1x128xf32, #tpu.memory_space<vmem>>, vector<1x128xf32>,
    } else {
    }
    %c0 = arith.constant 0 : index
    %c0_1 = arith.constant 0 : index
    %3 = vector.load %arg1[%c0, %c0_1] : memref<8x128xf32, #tpu.memory_space<vmem>>, vector<8x128xf32>
    %c0_2 = arith.constant 0 : index
    %c0_3 = arith.constant 0 : index
    %4 = vector.load %arg2[%c0_2, %c0_3] : memref<8x128xi32, #tpu.memory_space<vmem>>, vector<8x128xi32>
    %c-2_i32 = arith.constant -2 : i32
    %5 = vector.broadcast %c-2_i32 : i32 to vector<8x128xi32>
    %6 = arith.cmpi ne, %4, %5 : vector<8x128xi32>
    %7 = arith.extui %6 : vector<8x128xi1> to vector<8x128xi32>
    %8 = arith.sitofp %7 : vector<8x128xi32> to vector<8x128xf32>
    %c-1_i32 = arith.constant -1 : i32
    %9 = vector.broadcast %c-1_i32 : i32 to vector<8x128xi32>
    %10 = arith.cmpi eq, %4, %9 : vector<8x128xi32>
    %11 = arith.extui %10 : vector<8x128xi1> to vector<8x128xi32>
    %12 = arith.sitofp %11 : vector<8x128xi32> to vector<8x128xf32>
    %cst = arith.constant 0.000000e+00 : f32
    %13 = vector.broadcast %cst : f32 to vector<8x128xf32>
    %14 = arith.subf %13, %3 : vector<8x128xf32>
    %cst_4 = arith.constant 0.000000e+00 : f32
    %15 = vector.broadcast %cst_4 : f32 to vector<8x128xf32>
    %16 = arith.maximumf %14, %15 : vector<8x128xf32>
    %17 = math.absf %3 : vector<8x128xf32>
    %cst_5 = arith.constant 0.000000e+00 : f32
    %18 = vector.broadcast %cst_5 : f32 to vector<8x128xf32>
    %19 = arith.subf %18, %17 : vector<8x128xf32>
    %20 = math.exp %19 : vector<8x128xf32>
    %cst_6 = arith.constant 1.000000e+00 : f32
    %21 = vector.broadcast %cst_6 : f32 to vector<8x128xf32>
    %22 = arith.addf %21, %20 : vector<8x128xf32>
    %23 = math.log %22 : vector<8x128xf32>
    %24 = arith.addf %16, %23 : vector<8x128xf32>
    %cst_7 = arith.constant 1.000000e+00 : f32
    %25 = vector.broadcast %cst_7 : f32 to vector<8x128xf32>
    %26 = arith.subf %25, %12 : vector<8x128xf32>
    %27 = arith.mulf %26, %3 : vector<8x128xf32>
    %cst_8 = arith.constant 1.000000e+00 : f32
    %28 = vector.broadcast %cst_8 : f32 to vector<8x128xf32>
    %29 = arith.mulf %28, %12 : vector<8x128xf32>
    %cst_9 = arith.constant 1.000000e+00 : f32
    %30 = vector.broadcast %cst_9 : f32 to vector<8x128xf32>
    %31 = arith.addf %30, %29 : vector<8x128xf32>
    %32 = arith.mulf %31, %24 : vector<8x128xf32>
    %33 = arith.addf %27, %32 : vector<8x128xf32>
    %c0_10 = arith.constant 0 : index
    %c0_11 = arith.constant 0 : index
    %34 = vector.load %arg4[%c0_10, %c0_11] : memref<1x128xf32, #tpu.memory_space<vmem>>, vector<1x128xf32>
    %35 = arith.mulf %33, %8 : vector<8x128xf32>
    %cst_12 = arith.constant dense<0.000000e+00> : vector<128xf32>
    %36 = vector.multi_reduction <add>, %35, %cst_12 [0] : vector<8x128xf32> to vector<128xf32>
    %37 = vector.shape_cast %36 : vector<128xf32> to vector<1x128xf32>
    %38 = arith.addf %34, %37 : vector<1x128xf32>
    %c0_13 = arith.constant 0 : index
    %c0_14 = arith.constant 0 : index
    %39 = vector.load %arg4[%c0_13, %c0_14] : memref<1x128xf32, #tpu.memory_space<vmem>>, vector<1x128xf32>
    tpu.vector_store %arg4[%c0_13, %c0_14], %38 {strides = array<i32>} : memref<1x128xf32, #tpu.memory_space<vmem>>, vector<1x128xf32>,
    %c0_15 = arith.constant 0 : index
    %c0_16 = arith.constant 0 : index
    %40 = vector.load %arg5[%c0_15, %c0_16] : memref<1x128xf32, #tpu.memory_space<vmem>>, vector<1x128xf32>
    %cst_17 = arith.constant dense<0.000000e+00> : vector<128xf32>
    %41 = vector.multi_reduction <add>, %8, %cst_17 [0] : vector<8x128xf32> to vector<128xf32>
    %42 = vector.shape_cast %41 : vector<128xf32> to vector<1x128xf32>
    %43 = arith.addf %40, %42 : vector<1x128xf32>
    %c0_18 = arith.constant 0 : index
    %c0_19 = arith.constant 0 : index
    %44 = vector.load %arg5[%c0_18, %c0_19] : memref<1x128xf32, #tpu.memory_space<vmem>>, vector<1x128xf32>
    tpu.vector_store %arg5[%c0_18, %c0_19], %43 {strides = array<i32>} : memref<1x128xf32, #tpu.memory_space<vmem>>, vector<1x128xf32>,
    %c0_i32_20 = arith.constant 0 : i32
    %45 = arith.cmpi eq, %arg0, %c0_i32_20 : i32
    %46 = arith.extui %45 : i1 to i32
    %c0_i32_21 = arith.constant 0 : i32
    %47 = arith.cmpi ne, %46, %c0_i32_21 : i32
    scf.if %47 {
      %c0_22 = arith.constant 0 : index
      %c0_23 = arith.constant 0 : index
      %48 = vector.load %arg4[%c0_22, %c0_23] : memref<1x128xf32, #tpu.memory_space<vmem>>, vector<1x128xf32>
      %cst_24 = arith.constant dense<0.000000e+00> : vector<1xf32>
      %49 = vector.multi_reduction <add>, %48, %cst_24 [1] : vector<1x128xf32> to vector<1xf32>
      %50 = vector.shape_cast %49 : vector<1xf32> to vector<1x1xf32>
      %c0_25 = arith.constant 0 : index
      %c0_26 = arith.constant 0 : index
      %51 = vector.load %arg5[%c0_25, %c0_26] : memref<1x128xf32, #tpu.memory_space<vmem>>, vector<1x128xf32>
      %cst_27 = arith.constant dense<0.000000e+00> : vector<1xf32>
      %52 = vector.multi_reduction <add>, %51, %cst_27 [1] : vector<1x128xf32> to vector<1xf32>
      %53 = vector.shape_cast %52 : vector<1xf32> to vector<1x1xf32>
      %54 = arith.mulf %53, %53 : vector<1x1xf32>
      %55 = arith.divf %50, %54 : vector<1x1xf32>
      %c0_28 = arith.constant 0 : index
      %c0_29 = arith.constant 0 : index
      %56 = vector.load %arg3[%c0_28, %c0_29] : memref<1x1xf32, #tpu.memory_space<vmem>>, vector<1x1xf32>
      tpu.vector_store %arg3[%c0_28, %c0_29], %55 {strides = array<i32>} : memref<1x1xf32, #tpu.memory_space<vmem>>, vector<1x1xf32>,
    } else {
    }
    return
  }
  func.func @transform_0(%arg0: i32) -> (i32, i32) {
    %c0_i32 = arith.constant 0 : i32
    %c0_i32_0 = arith.constant 0 : i32
    return %arg0, %c0_i32 : i32, i32
  }
  func.func @transform_1(%arg0: i32) -> (i32, i32) {
    %c0_i32 = arith.constant 0 : i32
    %c0_i32_0 = arith.constant 0 : i32
    return %arg0, %c0_i32 : i32, i32
  }
  func.func @transform_2(%arg0: i32) -> (i32, i32) {
    %c0_i32 = arith.constant 0 : i32
    %c0_i32_0 = arith.constant 0 : i32
    %c0_i32_1 = arith.constant 0 : i32
    return %c0_i32, %c0_i32_0 : i32, i32
  }
}

</mosaic_0001>

<llo_original>
// kernel: false_measurement_loss.1
$region0: #{false_measurement_loss.1}
  #allocation0 [shape = 'u32[]', space=smem, size = 0x4, offset = 0x4, fixed_abs, tag = 'smem constant byte address 0x4 - core index']
  #allocation1 [shape = 'u32[144,128]{1,0:T(1,128)}', space=vmem, size = 0x12000, scoped, tag = 'internal scratch']
  #allocation2 [shape = 'f32[1,128]{1,0:T(1,128)}', space=vmem, size = 0x200, scoped, tag = 'scratch operand']
  #allocation3 [shape = 'f32[1,128]{1,0:T(1,128)}', space=vmem, size = 0x200, scoped, tag = 'scratch operand']
  %s0 = inlined_call_operand.vmem [shape: f32[8,128], index: 0, kind: input, shape index: {}]
  %s1 = inlined_call_operand.vmem [shape: s32[8,128], index: 1, kind: input, shape index: {}]
  %s2 = inlined_call_operand.hbm [shape: f32[1,1], index: 2, kind: output, shape index: {}]
  %s3 = sld [smem:[#allocation0]]
  $region26: #{false_measurement_loss.1} parent=0
    _
  %s5 = ssub.s32 1, %s3
  %s6 = scalar_select 0, %s5, %s3
  $region1: #{false_measurement_loss.1} parent=0
    #allocation4 [shape = 'u8[512]{0}', space=vmem, size = 0x400, scoped, tag = 'output window, operand 0, single buffered']
    #allocation5 [shape = 's32[1]{0}', space=sflag, size = 0x4, scoped, tag = 'scoped memory for false_measurement_loss.1']
    %7 = vsyncpa [#allocation5], 0
    // Predicated region
    $region2: #{false_measurement_loss.1} parent=1 // pred_check
      _
    $region3: #{false_measurement_loss.1} parent=1 // pred_check_branch
      %9 = sbr.rel (0) target = $region5
    $region4: #{false_measurement_loss.1} parent=1 // pred_region
      _
    $region5: #{false_measurement_loss.1} parent=1 // pred_fallthru
      _
    // Predicated region
    $region6: #{false_measurement_loss.1} parent=1 // pred_check
      _
    $region7: #{false_measurement_loss.1} parent=1 // pred_check_branch
      %11 = sbr.rel (0) target = $region9
    $region8: #{false_measurement_loss.1} parent=1 // pred_region
      _
    $region9: #{false_measurement_loss.1} parent=1 // pred_fallthru
      _
    %p12 = scmp.eq.s32.totalorder 0, 0
    // Predicated region
    $region10: #{false_measurement_loss.1} parent=1 // pred_check
      %p13 = pneg %p12
    $region11: #{false_measurement_loss.1} parent=1 // pred_check_branch
      %15 = sbr.rel (%p13) target = $region13
    $region12: #{false_measurement_loss.1} parent=1 // pred_region
      %16 = vst [vmem:[#allocation2] sm:$0x1] 0.0
      %17 = vst [vmem:[#allocation3] sm:$0x1] 0.0
    $region13: #{false_measurement_loss.1} parent=1 // pred_fallthru
      _
    %v18 = vld [vmem:[%s0] sm:$0xff]
    %v19 = vld [vmem:[%s1] sm:$0xff]
    %vm20 = vcmp.ne.s32.totalorder %v19, 4294967294
    %v21 = vsel %vm20, 1, 0
    %v22 = vcvt.s32.f32 %v21
    %vm23 = vcmp.eq.s32.totalorder %v19, 4294967295
    %v24 = vsel %vm23, 1, 0
    %v25 = vcvt.s32.f32 %v24
    %v26 = vsub.f32 0.0, %v18
    %v27 = vmax.f32 %v26, 0.0
    %v28 = vand.u32 2147483647, %v18
    %v29 = vsub.f32 0.0, %v28
    %v30 = vmul.f32 %v29, 1.442695
    %v31 = vpow.pop %v30
    %v32 = vadd.f32 %v31, 1.0
    %v33 = vlog2.pop %v32
    %v34 = vmul.f32 %v33, 0.6931472
    %v35 = vadd.f32 %v27, %v34
    %v36 = vsub.f32 1.0, %v25
    %v37 = vmul.f32 %v36, %v18
    %v38 = vadd.f32 %v25, 1.0
    %v39 = vmul.f32 %v38, %v35
    %v40 = vadd.f32 %v37, %v39
    %v41 = vld [vmem:[#allocation2] sm:$0x1]
    %v42 = vmul.f32 %v40, %v22
    %v43 = vrot.slane %v42, 4
    %v44 = vadd.f32 %v42, %v43
    %v45 = vrot.slane %v44, 2
    %v46 = vadd.f32 %v44, %v45
    %v47 = vrot.slane %v46, 1
    %v48 = vadd.f32 %v46, %v47
    %v49 = vadd.f32 %v41, %v48
    %50 = vst [vmem:[#allocation2] sm:$0x1] %v49
    %v51 = vld [vmem:[#allocation3] sm:$0x1]
    %v52 = vrot.slane %v22, 4
    %v53 = vadd.f32 %v22, %v52
    %v54 = vrot.slane %v53, 2
    %v55 = vadd.f32 %v53, %v54
    %v56 = vrot.slane %v55, 1
    %v57 = vadd.f32 %v55, %v56
    %v58 = vadd.f32 %v51, %v57
    %59 = vst [vmem:[#allocation3] sm:$0x1] %v58
    // Predicated region
    $region14: #{false_measurement_loss.1} parent=1 // pred_check
      %p60 = pneg %p12
    $region15: #{false_measurement_loss.1} parent=1 // pred_check_branch
      %62 = sbr.rel (%p60) target = $region17
    $region16: #{false_measurement_loss.1} parent=1 // pred_region
      %v63 = vld [vmem:[#allocation2] sm:$0x1]
      %vm64 = vcmask 1040384
      %v65 = vsel %vm64, %v63, 0.0
      %66 = vadd.xlane.f32.xlu0 %v65
      %v67 = vpop.xlane.xlu0 %66
      %v68 = vld [vmem:[#allocation3] sm:$0x1]
      %v69 = vsel %vm64, %v68, 0.0
      %70 = vadd.xlane.f32.xlu0 %v69
      %v71 = vpop.xlane.xlu0 %70
      %v72 = vmul.f32 %v71, %v71
      %v73 = vrcp.pop %v72
      %v74 = vmul.f32 %v67, %v73
      %vm75 = vcmask 0
      %76 = vst.msk [vmem:[#allocation4] sm:$0x1] %vm75, %v74
    $region17: #{false_measurement_loss.1} parent=1 // pred_fallthru
      _
    // Predicated region
    $region18: #{false_measurement_loss.1} parent=1 // pred_check
      _
    $region19: #{false_measurement_loss.1} parent=1 // pred_check_branch
      %78 = sbr.rel (0) target = $region21
    $region20: #{false_measurement_loss.1} parent=1 // pred_region
      %s80 = ssub.s32 16, 16
      %81 = vsyncadd [#allocation5], %s80
      %s83 = sshll.u32 [#allocation4], 4
      %s84 = int_to_ptr.vmem [resolvable:$true] %s83
      %86 = dma.vmem_to_hbm [thread:$0]  %s84, 16, %s2, [#allocation5]
    $region21: #{false_measurement_loss.1} parent=1 // pred_fallthru
      _
    // Predicated region
    $region22: #{false_measurement_loss.1} parent=1 // pred_check
      _
    $region23: #{false_measurement_loss.1} parent=1 // pred_check_branch
      %88 = sbr.rel (0) target = $region25
    $region24: #{false_measurement_loss.1} parent=1 // pred_region
      %89 = dma.done [#allocation5], 16
    $region25: #{false_measurement_loss.1} parent=1 // pred_fallthru
      _
    %90 = vsyncpa [#allocation5], 1

</llo_original>
